<compile_context>
chip_gen: v7x
topology: tpu7x:2x2x1
jax: 0.10.0
libtpu: 0.0.40
codegen_flags: <defaults>
</compile_context>

<pallas_src>
import functools

import jax
import jax.numpy as jnp
from jax import lax
from jax.experimental import pallas as pl
from jax.experimental.pallas import tpu as pltpu


def avalanche_kernel(xT_ref, w1_ref, b1_ref, w2_ref, b2_ref, w3_ref, b3_ref,
                     o_ref, *, chunk):
    """Fused MLP forward on one batch tile, batch on the lane dimension.

    xT_ref: [F,  TB]   (compute dtype)         -- batch tile, lane-major
    wN_ref: [out, in]  (compute dtype)          -- PyTorch layout, VMEM-resident
    bN_ref: [out, 1]   (f32)
    o_ref : [1,  TB]   (f32)                    -- lane-dense output

    The tile is processed in `chunk`-lane pieces so intermediates stay small
    even when TB is tens of thousands of lanes.
    """
    dt = xT_ref.dtype

    # Tiny, loaded once; live across the unrolled chunk loop.
    w1 = w1_ref[...]
    w2 = w2_ref[...]
    w3 = w3_ref[...]
    b1 = b1_ref[...]
    b2 = b2_ref[...]
    b3 = b3_ref[...]

    tb = o_ref.shape[-1]
    n_chunks = tb // chunk  # wrapper guarantees exact division

    def body(c, carry):
        start = pl.multiple_of(c * chunk, chunk)

        xt = xT_ref[:, pl.ds(start, chunk)]                       # [F, chunk]

        # layer1 + ReLU: [16, F] @ [F, chunk] -> [16, chunk]
        h1 = jnp.dot(w1, xt, preferred_element_type=jnp.float32)
        h1 = jnp.maximum(h1 + b1, 0.0)

        # layer2 + ReLU: [8, 16] @ [16, chunk] -> [8, chunk]
        h2 = jnp.dot(w2, h1.astype(dt), preferred_element_type=jnp.float32)
        h2 = jnp.maximum(h2 + b2, 0.0)

        # layer3 + Sigmoid: [1, 8] @ [8, chunk] -> [1, chunk]
        z = jnp.dot(w3, h2.astype(dt), preferred_element_type=jnp.float32)
        o_ref[:, pl.ds(start, chunk)] = jax.nn.sigmoid(z + b3)
        return carry

    lax.fori_loop(0, n_chunks, body, 0, unroll=True)


def _round_up(x, m):
    return ((x + m - 1) // m) * m


def avalanche_net_fm(xT, params, *, compute_dtype=jnp.float32,
                     max_tile=128 * 1024, chunk=8 * 1024, min_grid_steps=2,
                     vmem_limit_bytes=48 * 1024 * 1024):
    """Feature-major entry point (preferred): xT is [F, B].

    No wrapper-side transpose/pad pass over x -> no extra HBM traffic.
    Returns [1, B] float32 (lane-dense); transpose is the caller's choice.
    """
    F, B = xT.shape
    H1 = params["w1"].shape[0]
    H2 = params["w2"].shape[0]
    H3 = params["w3"].shape[0]

    # Batch tile: roughly B / min_grid_steps (keeps >= 2 grid steps for v7x
    # megacore sharding), multiple of the inner lane chunk, capped at max_tile.
    # At F=8 f32, a 128K tile is ~4 MiB of x per pipeline buffer.
    tb = _round_up(max(1, -(-B // min_grid_steps)), 128)
    tb = min(max_tile, tb)
    chunk = min(chunk, tb)
    tb = _round_up(tb, chunk)
    grid = (pl.cdiv(B, tb),)

    xT = xT.astype(compute_dtype)                     # no-op for f32 inputs
    w1 = params["w1"].astype(compute_dtype)
    w2 = params["w2"].astype(compute_dtype)
    w3 = params["w3"].astype(compute_dtype)
    b1 = params["b1"].astype(jnp.float32)             # [H1, 1]
    b2 = params["b2"].astype(jnp.float32)
    b3 = params["b3"].astype(jnp.float32)

    out = pl.pallas_call(
        functools.partial(avalanche_kernel, chunk=chunk),
        out_shape=jax.ShapeDtypeStruct((1, B), jnp.float32),
        grid_spec=pltpu.PrefetchScalarGridSpec(
            num_scalar_prefetch=0,
            grid=grid,
            in_specs=[
                # x tile marches along the batch (pipelined / double-buffered);
                # tail block is handled by Pallas' masked boundary behavior.
                pl.BlockSpec((F, tb), lambda i: (0, i)),
                # weights & biases: constant block index -> stay VMEM-resident
                pl.BlockSpec((H1, F), lambda i: (0, 0)),
                pl.BlockSpec((H1, 1), lambda i: (0, 0)),
                pl.BlockSpec((H2, H1), lambda i: (0, 0)),
                pl.BlockSpec((H2, 1), lambda i: (0, 0)),
                pl.BlockSpec((H3, H2), lambda i: (0, 0)),
                pl.BlockSpec((H3, 1), lambda i: (0, 0)),
            ],
            out_specs=pl.BlockSpec((1, tb), lambda i: (0, i)),
        ),
        compiler_params=pltpu.CompilerParams(
            dimension_semantics=("parallel",),
            vmem_limit_bytes=vmem_limit_bytes),
    )(xT, w1, b1, w2, b2, w3, b3)

    return out                                        # [1, B] f32


def avalanche_net(x, params, **kwargs):
    """Convenience wrapper matching the PyTorch interface: x is [B, F].

    Note: the transpose here is one extra HBM pass over x; performance-
    critical callers should produce x feature-major and call avalanche_net_fm.
    Returns [B, 1] float32 like the PyTorch module.
    """
    out = avalanche_net_fm(jnp.transpose(x), params, **kwargs)
    return out.T


def init_params(key, in_features):
    """PyTorch-style init; weights stored [out, in], biases [out, 1]."""
    ks = jax.random.split(key, 6)

    def lin(kw, kb, fin, fout):
        bound = 1.0 / jnp.sqrt(jnp.float32(fin))
        w = jax.random.uniform(kw, (fout, fin), jnp.float32, -bound, bound)
        b = jax.random.uniform(kb, (fout, 1), jnp.float32, -bound, bound)
        return w, b

    w1, b1 = lin(ks[0], ks[1], in_features, 16)
    w2, b2 = lin(ks[2], ks[3], 16, 8)
    w3, b3 = lin(ks[4], ks[5], 8, 1)
    return dict(w1=w1, b1=b1, w2=w2, b2=b2, w3=w3, b3=b3)


def reference(x, p):
    """Pure-JAX f32 reference matching the PyTorch forward (x: [B, F])."""
    h1 = jnp.maximum(x @ p["w1"].T + p["b1"].T, 0.0)
    h2 = jnp.maximum(h1 @ p["w2"].T + p["b2"].T, 0.0)
    return jax.nn.sigmoid(h2 @ p["w3"].T + p["b3"].T)


if __name__ == "__main__":
    key = jax.random.PRNGKey(0)
    k_p, k1, k2, k3 = jax.random.split(key, 4)

    in_features = 8  # X_train.shape[1] chosen as 8 (synthetic)
    params = init_params(k_p, in_features)

    # 1) Tiny batch: single tile, single inner chunk, f32.
    x_small = jax.random.normal(k1, (8, in_features), jnp.float32)
    out_small = avalanche_net(x_small, params)
    jax.block_until_ready(out_small)
    ref_small = reference(x_small, params)
    assert out_small.shape == (8, 1)
    assert jnp.allclose(out_small, ref_small, atol=1e-5, rtol=1e-5)

    # 2) Ragged batch -> 2 grid steps (megacore-shardable) + masked tail tile.
    x_rag = jax.random.normal(k2, (300, in_features), jnp.float32)
    out_rag = avalanche_net(x_rag, params)
    jax.block_until_ready(out_rag)
    ref_rag = reference(x_rag, params)
    assert out_rag.shape == (300, 1)
    assert jnp.allclose(out_rag, ref_rag, atol=1e-5, rtol=1e-5)

    # 3) Feature-major entry (no wrapper transpose pass): multiple grid steps
    #    AND multiple inner lane chunks per tile, with a masked tail tile.
    xT_big = jax.random.normal(k3, (in_features, 5000), jnp.float32)
    out_fm = avalanche_net_fm(xT_big, params, max_tile=2048, chunk=512)
    jax.block_until_ready(out_fm)
    ref_fm = reference(xT_big.T, params)
    assert out_fm.shape == (1, 5000)
    assert jnp.allclose(out_fm.T, ref_fm, atol=1e-5, rtol=1e-5)

    # 4) bf16 compute path (halves the dominant x HBM read); f32 accumulation.
    out_bf16 = avalanche_net_fm(xT_big, params, compute_dtype=jnp.bfloat16,
                                max_tile=2048, chunk=512)
    jax.block_until_ready(out_bf16)
    assert jnp.allclose(out_bf16.T, ref_fm, atol=2e-2, rtol=2e-2)

    print("KERNEL_OK")
</pallas_src>

<mosaic_0001>
module attributes {stable_mosaic.version = 11 : i64} {
  func.func @avalanche_kernel(%arg0: i32, %arg1: memref<8x128xf32, #tpu.memory_space<vmem>>, %arg2: memref<16x8xf32, #tpu.memory_space<vmem>>, %arg3: memref<16x1xf32, #tpu.memory_space<vmem>>, %arg4: memref<8x16xf32, #tpu.memory_space<vmem>>, %arg5: memref<8x1xf32, #tpu.memory_space<vmem>>, %arg6: memref<1x8xf32, #tpu.memory_space<vmem>>, %arg7: memref<1x1xf32, #tpu.memory_space<vmem>>, %arg8: memref<1x128xf32, #tpu.memory_space<vmem>>) attributes {dimension_semantics = [#tpu.dimension_semantics<parallel>], iteration_bounds = array<i64: 1>, scalar_prefetch = 0 : i64, scratch_operands = 0 : i64, tpu.core_type = #tpu.core_type<tc>, window_params = [{transform_indices = @transform_0, window_bounds = array<i64: 8, 128>}, {pipeline_mode = #tpu.pipeline_mode<synchronous>, transform_indices = @transform_1, window_bounds = array<i64: 16, 8>}, {pipeline_mode = #tpu.pipeline_mode<synchronous>, transform_indices = @transform_2, window_bounds = array<i64: 16, 1>}, {pipeline_mode = #tpu.pipeline_mode<synchronous>, transform_indices = @transform_3, window_bounds = array<i64: 8, 16>}, {pipeline_mode = #tpu.pipeline_mode<synchronous>, transform_indices = @transform_4, window_bounds = array<i64: 8, 1>}, {pipeline_mode = #tpu.pipeline_mode<synchronous>, transform_indices = @transform_5, window_bounds = array<i64: 1, 8>}, {pipeline_mode = #tpu.pipeline_mode<synchronous>, transform_indices = @transform_6, window_bounds = array<i64: 1, 1>}, {transform_indices = @transform_7, window_bounds = array<i64: 1, 128>}]} {
    %c0 = arith.constant 0 : index
    %c0_0 = arith.constant 0 : index
    %0 = vector.load %arg2[%c0, %c0_0] : memref<16x8xf32, #tpu.memory_space<vmem>>, vector<16x8xf32>
    %c0_1 = arith.constant 0 : index
    %c0_2 = arith.constant 0 : index
    %1 = vector.load %arg4[%c0_1, %c0_2] : memref<8x16xf32, #tpu.memory_space<vmem>>, vector<8x16xf32>
    %c0_3 = arith.constant 0 : index
    %c0_4 = arith.constant 0 : index
    %2 = vector.load %arg6[%c0_3, %c0_4] : memref<1x8xf32, #tpu.memory_space<vmem>>, vector<1x8xf32>
    %c0_5 = arith.constant 0 : index
    %c0_6 = arith.constant 0 : index
    %3 = vector.load %arg3[%c0_5, %c0_6] : memref<16x1xf32, #tpu.memory_space<vmem>>, vector<16x1xf32>
    %c0_7 = arith.constant 0 : index
    %c0_8 = arith.constant 0 : index
    %4 = vector.load %arg5[%c0_7, %c0_8] : memref<8x1xf32, #tpu.memory_space<vmem>>, vector<8x1xf32>
    %c0_9 = arith.constant 0 : index
    %c0_10 = arith.constant 0 : index
    %5 = vector.load %arg7[%c0_9, %c0_10] : memref<1x1xf32, #tpu.memory_space<vmem>>, vector<1x1xf32>
    %c0_i32 = arith.constant 0 : i32
    %c128_i32 = arith.constant 128 : i32
    %6 = arith.muli %c0_i32, %c128_i32 : i32
    %7 = tpu.assume_multiple %6, 128 : i32
    %c0_11 = arith.constant 0 : index
    %8 = arith.index_cast %7 : i32 to index
    %9 = vector.load %arg1[%c0_11, %8] : memref<8x128xf32, #tpu.memory_space<vmem>>, vector<8x128xf32>
    %cst = arith.constant dense<0.000000e+00> : vector<16x128xf32>
    %10 = tpu.matmul %0, %9, %cst {dimension_numbers = #tpu.dot_dimension_numbers<[1], [0], [0], [1], [0, 0, 1, 1], [], []>} : vector<16x8xf32>, vector<8x128xf32>, vector<16x128xf32> -> vector<16x128xf32>
    %11 = vector.broadcast %3 : vector<16x1xf32> to vector<16x128xf32>
    %12 = arith.addf %10, %11 : vector<16x128xf32>
    %cst_12 = arith.constant 0.000000e+00 : f32
    %13 = vector.broadcast %cst_12 : f32 to vector<16x128xf32>
    %14 = arith.maximumf %12, %13 : vector<16x128xf32>
    %cst_13 = arith.constant dense<0.000000e+00> : vector<8x128xf32>
    %15 = tpu.matmul %1, %14, %cst_13 {dimension_numbers = #tpu.dot_dimension_numbers<[1], [0], [0], [1], [0, 0, 1, 1], [], []>} : vector<8x16xf32>, vector<16x128xf32>, vector<8x128xf32> -> vector<8x128xf32>
    %16 = vector.broadcast %4 : vector<8x1xf32> to vector<8x128xf32>
    %17 = arith.addf %15, %16 : vector<8x128xf32>
    %cst_14 = arith.constant 0.000000e+00 : f32
    %18 = vector.broadcast %cst_14 : f32 to vector<8x128xf32>
    %19 = arith.maximumf %17, %18 : vector<8x128xf32>
    %cst_15 = arith.constant dense<0.000000e+00> : vector<1x128xf32>
    %20 = tpu.matmul %2, %19, %cst_15 {dimension_numbers = #tpu.dot_dimension_numbers<[1], [0], [0], [1], [0, 0, 1, 1], [], []>} : vector<1x8xf32>, vector<8x128xf32>, vector<1x128xf32> -> vector<1x128xf32>
    %21 = vector.broadcast %5 : vector<1x1xf32> to vector<1x128xf32>
    %22 = arith.addf %20, %21 : vector<1x128xf32>
    %23 = arith.negf %22 : vector<1x128xf32>
    %24 = math.exp %23 : vector<1x128xf32>
    %cst_16 = arith.constant 1.000000e+00 : f32
    %25 = vector.broadcast %cst_16 : f32 to vector<1x128xf32>
    %26 = arith.addf %25, %24 : vector<1x128xf32>
    %27 = arith.divf %25, %26 : vector<1x128xf32>
    %c0_17 = arith.constant 0 : index
    %28 = arith.index_cast %7 : i32 to index
    %29 = vector.load %arg8[%c0_17, %28] : memref<1x128xf32, #tpu.memory_space<vmem>>, vector<1x128xf32>
    tpu.vector_store %arg8[%c0_17, %28], %27 {strides = array<i32>} : memref<1x128xf32, #tpu.memory_space<vmem>>, vector<1x128xf32>,
    %c1_i32 = arith.constant 1 : i32
    return
  }
  func.func @transform_0(%arg0: i32) -> (i32, i32) {
    %c0_i32 = arith.constant 0 : i32
    %c0_i32_0 = arith.constant 0 : i32
    return %c0_i32, %arg0 : i32, i32
  }
  func.func @transform_1(%arg0: i32) -> (i32, i32) {
    %c0_i32 = arith.constant 0 : i32
    %c0_i32_0 = arith.constant 0 : i32
    %c0_i32_1 = arith.constant 0 : i32
    return %c0_i32, %c0_i32_0 : i32, i32
  }
  func.func @transform_2(%arg0: i32) -> (i32, i32) {
    %c0_i32 = arith.constant 0 : i32
    %c0_i32_0 = arith.constant 0 : i32
    %c0_i32_1 = arith.constant 0 : i32
    return %c0_i32, %c0_i32_0 : i32, i32
  }
  func.func @transform_3(%arg0: i32) -> (i32, i32) {
    %c0_i32 = arith.constant 0 : i32
    %c0_i32_0 = arith.constant 0 : i32
    %c0_i32_1 = arith.constant 0 : i32
    return %c0_i32, %c0_i32_0 : i32, i32
  }
  func.func @transform_4(%arg0: i32) -> (i32, i32) {
    %c0_i32 = arith.constant 0 : i32
    %c0_i32_0 = arith.constant 0 : i32
    %c0_i32_1 = arith.constant 0 : i32
    return %c0_i32, %c0_i32_0 : i32, i32
  }
  func.func @transform_5(%arg0: i32) -> (i32, i32) {
    %c0_i32 = arith.constant 0 : i32
    %c0_i32_0 = arith.constant 0 : i32
    %c0_i32_1 = arith.constant 0 : i32
    return %c0_i32, %c0_i32_0 : i32, i32
  }
  func.func @transform_6(%arg0: i32) -> (i32, i32) {
    %c0_i32 = arith.constant 0 : i32
    %c0_i32_0 = arith.constant 0 : i32
    %c0_i32_1 = arith.constant 0 : i32
    return %c0_i32, %c0_i32_0 : i32, i32
  }
  func.func @transform_7(%arg0: i32) -> (i32, i32) {
    %c0_i32 = arith.constant 0 : i32
    %c0_i32_0 = arith.constant 0 : i32
    return %c0_i32, %arg0 : i32, i32
  }
}

</mosaic_0001>

<llo_original>
// kernel: tpu_custom_call.1
$region0: #{tpu_custom_call.1}
  #allocation0 [shape = 'u32[]', space=smem, size = 0x4, offset = 0x4, fixed_abs, tag = 'smem constant byte address 0x4 - core index']
  #allocation1 [shape = 'u32[144,128]{1,0:T(1,128)}', space=vmem, size = 0x12000, scoped, tag = 'internal scratch']
  #allocation2 [shape = 'f32[1,1]{1,0:T(1,128)S(1)}', space=vmem, size = 0x200, scoped, tag = 'scoped memory for tpu_custom_call.1']
  %s0 = inlined_call_operand.vmem [shape: f32[8,8], index: 0, kind: input, shape index: {}]
  %s1 = inlined_call_operand.vmem [shape: f32[16,8], index: 1, kind: input, shape index: {}]
  %s2 = inlined_call_operand.vmem [shape: f32[16,1], index: 2, kind: input, shape index: {}]
  %s3 = inlined_call_operand.vmem [shape: f32[8,16], index: 3, kind: input, shape index: {}]
  %s4 = inlined_call_operand.vmem [shape: f32[8,1], index: 4, kind: input, shape index: {}]
  %s5 = inlined_call_operand.vmem [shape: f32[1,8], index: 5, kind: input, shape index: {}]
  %s6 = inlined_call_operand.<no memory space> [shape: f32[1,1], index: 6, kind: input, shape index: {}]
  %s7 = inlined_call_operand.hbm [shape: f32[1,8], index: 7, kind: output, shape index: {}]
  %s8 = sld [smem:[#allocation0]]
  $region38: #{tpu_custom_call.1} parent=0
    _
  %s10 = ssub.s32 1, %s8
  %s11 = scalar_select 0, %s10, %s8
  %v12 = vstv %s6
  %13 = vst [vmem:[#allocation2] sm:$0x1] %v12
  $region1: #{tpu_custom_call.1} parent=0
    #allocation3 [shape = 'u8[512]{0}', space=vmem, size = 0x400, scoped, tag = 'output window, operand 0, single buffered']
    #allocation4 [shape = 's32[1]{0}', space=sflag, size = 0x4, scoped, tag = 'scoped memory for tpu_custom_call.1']
    %14 = vsyncpa [#allocation4], 0
    // Predicated region
    $region2: #{tpu_custom_call.1} parent=1 // pred_check
      _
    $region3: #{tpu_custom_call.1} parent=1 // pred_check_branch
      %16 = sbr.rel (0) target = $region5
    $region4: #{tpu_custom_call.1} parent=1 // pred_region
      _
    $region5: #{tpu_custom_call.1} parent=1 // pred_fallthru
      _
    // Predicated region
    $region6: #{tpu_custom_call.1} parent=1 // pred_check
      _
    $region7: #{tpu_custom_call.1} parent=1 // pred_check_branch
      %18 = sbr.rel (0) target = $region9
    $region8: #{tpu_custom_call.1} parent=1 // pred_region
      _
    $region9: #{tpu_custom_call.1} parent=1 // pred_fallthru
      _
    // Predicated region
    $region10: #{tpu_custom_call.1} parent=1 // pred_check
      _
    $region11: #{tpu_custom_call.1} parent=1 // pred_check_branch
      %20 = sbr.rel (0) target = $region13
    $region12: #{tpu_custom_call.1} parent=1 // pred_region
      _
    $region13: #{tpu_custom_call.1} parent=1 // pred_fallthru
      _
    // Predicated region
    $region14: #{tpu_custom_call.1} parent=1 // pred_check
      _
    $region15: #{tpu_custom_call.1} parent=1 // pred_check_branch
      %22 = sbr.rel (0) target = $region17
    $region16: #{tpu_custom_call.1} parent=1 // pred_region
      _
    $region17: #{tpu_custom_call.1} parent=1 // pred_fallthru
      _
    // Predicated region
    $region18: #{tpu_custom_call.1} parent=1 // pred_check
      _
    $region19: #{tpu_custom_call.1} parent=1 // pred_check_branch
      %24 = sbr.rel (0) target = $region21
    $region20: #{tpu_custom_call.1} parent=1 // pred_region
      _
    $region21: #{tpu_custom_call.1} parent=1 // pred_fallthru
      _
    // Predicated region
    $region22: #{tpu_custom_call.1} parent=1 // pred_check
      _
    $region23: #{tpu_custom_call.1} parent=1 // pred_check_branch
      %26 = sbr.rel (0) target = $region25
    $region24: #{tpu_custom_call.1} parent=1 // pred_region
      _
    $region25: #{tpu_custom_call.1} parent=1 // pred_fallthru
      _
    // Predicated region
    $region26: #{tpu_custom_call.1} parent=1 // pred_check
      _
    $region27: #{tpu_custom_call.1} parent=1 // pred_check_branch
      %28 = sbr.rel (0) target = $region29
    $region28: #{tpu_custom_call.1} parent=1 // pred_region
      _
    $region29: #{tpu_custom_call.1} parent=1 // pred_fallthru
      _
    %v29 = vld [vmem:[%s1] sm:$0xff]
    %v30 = vld [vmem:[%s1 + $0x8] sm:$0xff]
    %v31 = vld [vmem:[%s3] sm:$0xff]
    %v32 = vld [vmem:[%s5] sm:$0x1]
    %v33 = vld [vmem:[%s2] sm:$0xff]
    %v34 = vld [vmem:[%s2 + $0x8] sm:$0xff]
    %v35 = vld [vmem:[%s4] sm:$0xff]
    %v36 = vld [vmem:[#allocation2] sm:$0x1]
    %v37 = vld [vmem:[%s0] sm:$0xff]
    %39 = vset.pattern.permute.xlu0 0
    %40 = vperm.xlu0 %39, %v33
    %v41 = vpop.permute.xlu0 %40
    %44 = vset.pattern.permute.xlu0 0
    %45 = vperm.xlu0 %44, %v34
    %v46 = vpop.permute.xlu0 %45
    %vm48 = vcmask 64512
    %v50 = vsel %vm48, %v29, 0
    %v53 = vsel %vm48, %v30, 0
    %55 = vmatprep.subr.mxu0 0.0
    %56 = vmatpush1.msra.mxu0 %v37
    %57 = vmatprep.subr.mxu0 0.0
    %58 = vmatpush1.msra.mxu0 0.0
    %59 = vmatprep.subr.mxu0 0.0
    %60 = vmatpush1.msra.mxu0 0.0
    %61 = vmatprep.subr.mxu0 0.0
    %62 = vmatpush1.msra.mxu0 0.0
    %63 = vmatprep.subr.mxu0 0.0
    %64 = vmatpush1.msra.mxu0 0.0
    %65 = vmatprep.subr.mxu0 0.0
    %66 = vmatpush1.msra.mxu0 0.0
    %67 = vmatprep.subr.mxu0 0.0
    %68 = vmatpush1.msra.mxu0 0.0
    %69 = vmatprep.subr.mxu0 0.0
    %70 = vmatpush1.msra.mxu0 0.0
    %71 = vmatprep.subr.mxu0 0.0
    %72 = vmatpush1.msra.mxu0 0.0
    %73 = vmatprep.subr.mxu0 0.0
    %74 = vmatpush1.msra.mxu0 0.0
    %75 = vmatprep.subr.mxu0 0.0
    %76 = vmatpush1.msra.mxu0 0.0
    %77 = vmatprep.subr.mxu0 0.0
    %78 = vmatpush1.msra.mxu0 0.0
    %79 = vmatprep.subr.mxu0 0.0
    %80 = vmatpush1.msra.mxu0 0.0
    %81 = vmatprep.subr.mxu0 0.0
    %82 = vmatpush1.msra.mxu0 0.0
    %83 = vmatprep.subr.mxu0 0.0
    %84 = vmatpush1.msra.mxu0 0.0
    %85 = vmatprep.subr.mxu0 0.0
    %86 = vmatpush1.msra.mxu0 0.0
    %87 = vmatprep.subr.mxu0 0.0
    %88 = vmatpush1.msra.mxu0 0.0
    %89 = vmatprep.subr.mxu0 0.0
    %90 = vmatpush1.msra.mxu0 0.0
    %91 = vmatprep.subr.mxu0 0.0
    %92 = vmatpush1.msra.mxu0 0.0
    %93 = vmatprep.subr.mxu0 0.0
    %94 = vmatpush1.msra.mxu0 0.0
    %95 = vmatprep.subr.mxu0 0.0
    %96 = vmatpush1.msra.mxu0 0.0
    %97 = vmatprep.subr.mxu0 0.0
    %98 = vmatpush1.msra.mxu0 0.0
    %99 = vmatprep.subr.mxu0 0.0
    %100 = vmatpush1.msra.mxu0 0.0
    %101 = vmatprep.subr.mxu0 0.0
    %102 = vmatpush1.msra.mxu0 0.0
    %103 = vmatprep.subr.mxu0 0.0
    %104 = vmatpush1.msra.mxu0 0.0
    %105 = vmatprep.subr.mxu0 0.0
    %106 = vmatpush1.msra.mxu0 0.0
    %107 = vmatprep.subr.mxu0 0.0
    %108 = vmatpush1.msra.mxu0 0.0
    %109 = vmatprep.subr.mxu0 0.0
    %110 = vmatpush1.msra.mxu0 0.0
    %111 = vmatprep.subr.mxu0 0.0
    %112 = vmatpush1.msra.mxu0 0.0
    %113 = vmatprep.subr.mxu0 0.0
    %114 = vmatpush1.msra.mxu0 0.0
    %115 = vmatprep.subr.mxu0 0.0
    %116 = vmatpush1.msra.mxu0 0.0
    %117 = vmatprep.subr.mxu0 0.0
    %118 = vmatpush1.msra.mxu0 0.0
    %119 = vmatprep.mubr.f32.mxu0 0.0
    %120 = vmatmul.mubr.f32.gmra.mrb[0].mxu0 %v50
    %v121 = vpop.f32.mrb[0].mxu0
    %v122 = vadd.f32 %v41, %v121
    %v123 = vpop.f32.mrb[0].mxu0
    %124 = vmatprep.mubr.f32.mxu0 0.0
    %125 = vmatmul.mubr.f32.gmra.mrb[0].mxu0 %v53
    %v126 = vpop.f32.mrb[0].mxu0
    %v127 = vadd.f32 %v46, %v126
    %v128 = vpop.f32.mrb[0].mxu0
    %129 = vdwg.mxu0
    %v130 = vmax.f32 %v122, 0.0
    %v131 = vmax.f32 %v127, 0.0
    %133 = vset.pattern.permute.xlu0 0
    %134 = vperm.xlu0 %133, %v35
    %v135 = vpop.permute.xlu0 %134
    %vm137 = vcmask 130048
    %v139 = vsel %vm137, %v31, 0
    %141 = vmatprep.subr.mxu0 0.0
    %142 = vmatpush1.msra.mxu0 %v130
    %143 = vmatprep.subr.mxu0 0.0
    %144 = vmatpush1.msra.mxu0 %v131
    %145 = vmatprep.subr.mxu0 0.0
    %146 = vmatpush1.msra.mxu0 0.0
    %147 = vmatprep.subr.mxu0 0.0
    %148 = vmatpush1.msra.mxu0 0.0
    %149 = vmatprep.subr.mxu0 0.0
    %150 = vmatpush1.msra.mxu0 0.0
    %151 = vmatprep.subr.mxu0 0.0
    %152 = vmatpush1.msra.mxu0 0.0
    %153 = vmatprep.subr.mxu0 0.0
    %154 = vmatpush1.msra.mxu0 0.0
    %155 = vmatprep.subr.mxu0 0.0
    %156 = vmatpush1.msra.mxu0 0.0
    %157 = vmatprep.subr.mxu0 0.0
    %158 = vmatpush1.msra.mxu0 0.0
    %159 = vmatprep.subr.mxu0 0.0
    %160 = vmatpush1.msra.mxu0 0.0
    %161 = vmatprep.subr.mxu0 0.0
    %162 = vmatpush1.msra.mxu0 0.0
    %163 = vmatprep.subr.mxu0 0.0
    %164 = vmatpush1.msra.mxu0 0.0
    %165 = vmatprep.subr.mxu0 0.0
    %166 = vmatpush1.msra.mxu0 0.0
    %167 = vmatprep.subr.mxu0 0.0
    %168 = vmatpush1.msra.mxu0 0.0
    %169 = vmatprep.subr.mxu0 0.0
    %170 = vmatpush1.msra.mxu0 0.0
    %171 = vmatprep.subr.mxu0 0.0
    %172 = vmatpush1.msra.mxu0 0.0
    %173 = vmatprep.subr.mxu0 0.0
    %174 = vmatpush1.msra.mxu0 0.0
    %175 = vmatprep.subr.mxu0 0.0
    %176 = vmatpush1.msra.mxu0 0.0
    %177 = vmatprep.subr.mxu0 0.0
    %178 = vmatpush1.msra.mxu0 0.0
    %179 = vmatprep.subr.mxu0 0.0
    %180 = vmatpush1.msra.mxu0 0.0
    %181 = vmatprep.subr.mxu0 0.0
    %182 = vmatpush1.msra.mxu0 0.0
    %183 = vmatprep.subr.mxu0 0.0
    %184 = vmatpush1.msra.mxu0 0.0
    %185 = vmatprep.subr.mxu0 0.0
    %186 = vmatpush1.msra.mxu0 0.0
    %187 = vmatprep.subr.mxu0 0.0
    %188 = vmatpush1.msra.mxu0 0.0
    %189 = vmatprep.subr.mxu0 0.0
    %190 = vmatpush1.msra.mxu0 0.0
    %191 = vmatprep.subr.mxu0 0.0
    %192 = vmatpush1.msra.mxu0 0.0
    %193 = vmatprep.subr.mxu0 0.0
    %194 = vmatpush1.msra.mxu0 0.0
    %195 = vmatprep.subr.mxu0 0.0
    %196 = vmatpush1.msra.mxu0 0.0
    %197 = vmatprep.subr.mxu0 0.0
    %198 = vmatpush1.msra.mxu0 0.0
    %199 = vmatprep.subr.mxu0 0.0
    %200 = vmatpush1.msra.mxu0 0.0
    %201 = vmatprep.subr.mxu0 0.0
    %202 = vmatpush1.msra.mxu0 0.0
    %203 = vmatprep.subr.mxu0 0.0
    %204 = vmatpush1.msra.mxu0 0.0
    %205 = vmatprep.mubr.f32.mxu0 0.0
    %206 = vmatmul.mubr.f32.gmra.mrb[0].mxu0 %v139
    %v207 = vpop.f32.mrb[0].mxu0
    %v208 = vadd.f32 %v135, %v207
    %v209 = vpop.f32.mrb[0].mxu0
    %210 = vdwg.mxu0
    %v211 = vmax.f32 %v208, 0.0
    %213 = vset.pattern.permute.xlu0 0
    %214 = vperm.xlu0 %213, %v36
    %v215 = vpop.permute.xlu0 %214
    %v217 = vlaneseq
    %v218 = vshrl.u32 %v217, 7
    %v219 = vsub.s32 0, %v218
    %v220 = vrot.slane %v215, %v219
    %v222 = vsel %vm48, %v32, 0
    %224 = vmatprep.subr.mxu0 0.0
    %225 = vmatpush1.msra.mxu0 %v211
    %226 = vmatprep.subr.mxu0 0.0
    %227 = vmatpush1.msra.mxu0 0.0
    %228 = vmatprep.subr.mxu0 0.0
    %229 = vmatpush1.msra.mxu0 0.0
    %230 = vmatprep.subr.mxu0 0.0
    %231 = vmatpush1.msra.mxu0 0.0
    %232 = vmatprep.subr.mxu0 0.0
    %233 = vmatpush1.msra.mxu0 0.0
    %234 = vmatprep.subr.mxu0 0.0
    %235 = vmatpush1.msra.mxu0 0.0
    %236 = vmatprep.subr.mxu0 0.0
    %237 = vmatpush1.msra.mxu0 0.0
    %238 = vmatprep.subr.mxu0 0.0
    %239 = vmatpush1.msra.mxu0 0.0
    %240 = vmatprep.subr.mxu0 0.0
    %241 = vmatpush1.msra.mxu0 0.0
    %242 = vmatprep.subr.mxu0 0.0
    %243 = vmatpush1.msra.mxu0 0.0
    %244 = vmatprep.subr.mxu0 0.0
    %245 = vmatpush1.msra.mxu0 0.0
    %246 = vmatprep.subr.mxu0 0.0
    %247 = vmatpush1.msra.mxu0 0.0
    %248 = vmatprep.subr.mxu0 0.0
    %249 = vmatpush1.msra.mxu0 0.0
    %250 = vmatprep.subr.mxu0 0.0
    %251 = vmatpush1.msra.mxu0 0.0
    %252 = vmatprep.subr.mxu0 0.0
    %253 = vmatpush1.msra.mxu0 0.0
    %254 = vmatprep.subr.mxu0 0.0
    %255 = vmatpush1.msra.mxu0 0.0
    %256 = vmatprep.subr.mxu0 0.0
    %257 = vmatpush1.msra.mxu0 0.0
    %258 = vmatprep.subr.mxu0 0.0
    %259 = vmatpush1.msra.mxu0 0.0
    %260 = vmatprep.subr.mxu0 0.0
    %261 = vmatpush1.msra.mxu0 0.0
    %262 = vmatprep.subr.mxu0 0.0
    %263 = vmatpush1.msra.mxu0 0.0
    %264 = vmatprep.subr.mxu0 0.0
    %265 = vmatpush1.msra.mxu0 0.0
    %266 = vmatprep.subr.mxu0 0.0
    %267 = vmatpush1.msra.mxu0 0.0
    %268 = vmatprep.subr.mxu0 0.0
    %269 = vmatpush1.msra.mxu0 0.0
    %270 = vmatprep.subr.mxu0 0.0
    %271 = vmatpush1.msra.mxu0 0.0
    %272 = vmatprep.subr.mxu0 0.0
    %273 = vmatpush1.msra.mxu0 0.0
    %274 = vmatprep.subr.mxu0 0.0
    %275 = vmatpush1.msra.mxu0 0.0
    %276 = vmatprep.subr.mxu0 0.0
    %277 = vmatpush1.msra.mxu0 0.0
    %278 = vmatprep.subr.mxu0 0.0
    %279 = vmatpush1.msra.mxu0 0.0
    %280 = vmatprep.subr.mxu0 0.0
    %281 = vmatpush1.msra.mxu0 0.0
    %282 = vmatprep.subr.mxu0 0.0
    %283 = vmatpush1.msra.mxu0 0.0
    %284 = vmatprep.subr.mxu0 0.0
    %285 = vmatpush1.msra.mxu0 0.0
    %286 = vmatprep.subr.mxu0 0.0
    %287 = vmatpush1.msra.mxu0 0.0
    %288 = vmatprep.mubr.f32.mxu0 0.0
    %289 = vmatmul.mubr.f32.gmra.mrb[0].mxu0 %v222
    %v290 = vpop.f32.mrb[0].mxu0
    %v291 = vadd.f32 %v220, %v290
    %v292 = vpop.f32.mrb[0].mxu0
    %293 = vdwg.mxu0
    %v294 = vxor.u32 %v291, 2147483648
    %v295 = vmul.f32 %v294, 1.442695
    %v296 = vpow.pop %v295
    %v297 = vadd.f32 %v296, 1.0
    %v298 = vrcp.pop %v297
    %v299 = vmul.f32 1.0, %v298
    %300 = vst [vmem:[#allocation3] sm:$0x1] %v299
    // Predicated region
    $region30: #{tpu_custom_call.1} parent=1 // pred_check
      _
    $region31: #{tpu_custom_call.1} parent=1 // pred_check_branch
      %302 = sbr.rel (0) target = $region33
    $region32: #{tpu_custom_call.1} parent=1 // pred_region
      %s304 = ssub.s32 16, 16
      %305 = vsyncadd [#allocation4], %s304
      %s307 = sshll.u32 [#allocation3], 4
      %s308 = int_to_ptr.vmem [resolvable:$true] %s307
      %310 = dma.vmem_to_hbm [thread:$0]  %s308, 16, %s7, [#allocation4]
    $region33: #{tpu_custom_call.1} parent=1 // pred_fallthru
      _
    // Predicated region
    $region34: #{tpu_custom_call.1} parent=1 // pred_check
      _
    $region35: #{tpu_custom_call.1} parent=1 // pred_check_branch
      %312 = sbr.rel (0) target = $region37
    $region36: #{tpu_custom_call.1} parent=1 // pred_region
      %313 = dma.done [#allocation4], 16
    $region37: #{tpu_custom_call.1} parent=1 // pred_fallthru
      _
    %314 = vsyncpa [#allocation4], 1

</llo_original>
